<compile_context>
chip_gen: v7x
topology: tpu7x:2x2x1
jax: 0.10.0
libtpu: 0.0.40
codegen_flags: <defaults>
</compile_context>

<pallas_src>
import functools

import jax
import jax.numpy as jnp
from jax.experimental import pallas as pl
from jax.experimental.pallas import tpu as pltpu


def _round_up(x, m):
    return (x + m - 1) // m * m


def _pick_tiles(NC, S, itemsize, sublane, target_bytes):
    """Choose (block_rows, block_cols) for the (NC, S) view.

    Blocks are either full-extent along a dim or (sublane, 128)-aligned, so the
    cdiv grid with boundary masking is always legal. Prefers full-width column
    tiles (fully contiguous HBM transfers)."""
    # Columns: full width if one sublane-group row stripe fits the budget.
    if S * sublane * itemsize <= target_bytes:
        block_cols = S
    else:
        max_cols = max(128, (target_bytes // (sublane * itemsize)) // 128 * 128)
        block_cols = min(_round_up(S, 128), max_cols)
        if block_cols >= S:
            block_cols = S
    # Rows: fill the remaining budget with sublane-aligned row counts.
    bytes_per_row = max(1, block_cols * itemsize)
    rows_cap = max(1, target_bytes // bytes_per_row)
    if NC <= rows_cap:
        block_rows = NC
    else:
        block_rows = max(sublane, (rows_cap // sublane) * sublane)
        if block_rows >= NC:
            block_rows = NC
    return block_rows, block_cols


def _fused_lrelu_kernel(x_ref, b_ref, o_ref, *, negative_slope, scale):
    x = x_ref[...]                      # (block_rows, block_cols)
    b = b_ref[...]                      # (block_rows, 1), already x.dtype
    xb = x + b
    pos = jnp.asarray(scale, dtype=xb.dtype)
    neg = jnp.asarray(scale * negative_slope, dtype=xb.dtype)
    o_ref[...] = (xb * jnp.where(xb >= 0, pos, neg)).astype(o_ref.dtype)


def fused_leaky_relu3d(x, bias, negative_slope=0.2, scale=2 ** 0.5,
                       target_block_bytes=8 * 1024 * 1024):
    """x: (N, C, D, H, W); bias: (C,). Returns scale * leaky_relu(x + bias)."""
    N, C, D, H, W = x.shape
    S = D * H * W
    NC = N * C

    itemsize = jnp.dtype(x.dtype).itemsize
    sublane = {4: 8, 2: 16, 1: 32}.get(itemsize, 8)

    # Free reshapes (views): rows = (n, c) pairs, cols = spatial elements.
    x2 = x.reshape(NC, S)
    # Bias per row, pre-cast to the compute dtype (exact for float32 inputs).
    b2 = jnp.broadcast_to(bias[None, :], (N, C)).reshape(NC, 1).astype(x.dtype)

    block_rows, block_cols = _pick_tiles(NC, S, itemsize, sublane, target_block_bytes)
    grid = (pl.cdiv(NC, block_rows), pl.cdiv(S, block_cols))

    # Explicit scoped-VMEM budget: double-buffered input + output blocks plus
    # the (tiny) bias blocks. Stays well under v7x's 64 MiB physical VMEM.
    block_bytes = block_rows * block_cols * itemsize
    bias_block_bytes = _round_up(block_rows, sublane) * 128 * itemsize
    vmem_needed = 4 * block_bytes + 4 * bias_block_bytes + (1 << 20)
    vmem_limit = int(min(64 << 20, max(32 << 20, vmem_needed)))

    kernel = functools.partial(
        _fused_lrelu_kernel,
        negative_slope=float(negative_slope),
        scale=float(scale),
    )

    cost = pl.CostEstimate(
        flops=3 * NC * S,
        transcendentals=0,
        bytes_accessed=2 * NC * S * itemsize + NC * itemsize,
    )

    out2 = pl.pallas_call(
        kernel,
        out_shape=jax.ShapeDtypeStruct((NC, S), x.dtype),
        grid_spec=pltpu.PrefetchScalarGridSpec(
            num_scalar_prefetch=0,
            grid=grid,
            in_specs=[
                pl.BlockSpec((block_rows, block_cols), lambda i, j: (i, j)),
                # Per-row-stripe bias block; only re-fetched when i changes
                # (j is the inner grid axis).
                pl.BlockSpec((block_rows, 1), lambda i, j: (i, 0)),
            ],
            out_specs=pl.BlockSpec((block_rows, block_cols), lambda i, j: (i, j)),
        ),
        compiler_params=pltpu.CompilerParams(
            dimension_semantics=("parallel", "parallel"),
            vmem_limit_bytes=vmem_limit,
        ),
        cost_estimate=cost,
    )(x2, b2)

    return out2.reshape(N, C, D, H, W)


class FusedLeakyReLU3D:
    """Mirror of the PyTorch module; bias initialized to zeros (as in __init__)."""

    def __init__(self, channel, negative_slope=0.2, scale=2 ** 0.5):
        self.bias = jnp.zeros((channel,), dtype=jnp.float32)
        self.negative_slope = negative_slope
        self.scale = scale

    def __call__(self, x):
        return fused_leaky_relu3d(x, self.bias, self.negative_slope, self.scale)


def _reference(x, bias, negative_slope=0.2, scale=2 ** 0.5):
    xb = x + bias.reshape((1, -1) + (1,) * (x.ndim - 2)).astype(x.dtype)
    return scale * jnp.where(xb >= 0, xb, negative_slope * xb)


if __name__ == "__main__":
    key = jax.random.PRNGKey(0)
    kx, kb, kx2, kb2, kx3, kb3 = jax.random.split(key, 6)

    # 1) Aligned small shape (NC=8, S=512): single full block.
    N, C, D, H, W = 2, 4, 8, 8, 8
    x = jax.random.normal(kx, (N, C, D, H, W), dtype=jnp.float32)
    bias = jax.random.normal(kb, (C,), dtype=jnp.float32)

    module = FusedLeakyReLU3D(C)
    out_zero_bias = module(x)
    out = fused_leaky_relu3d(x, bias)

    # 2) Unaligned shape (NC=3, S=140): full-extent (unpadded) block, no pad/slice passes.
    x_odd = jax.random.normal(kx2, (1, 3, 4, 5, 7), dtype=jnp.float32)
    bias_odd = jax.random.normal(kb2, (3,), dtype=jnp.float32)
    out_odd = fused_leaky_relu3d(x_odd, bias_odd)

    # 3) Force tiling with cdiv boundary masking on both axes
    #    (NC=10 -> rows 8+2, S=140 -> cols 128+12) via a tiny block budget.
    x_tile = jax.random.normal(kx3, (2, 5, 4, 5, 7), dtype=jnp.float32)
    bias_tile = jax.random.normal(kb3, (5,), dtype=jnp.float32)
    out_tile = fused_leaky_relu3d(x_tile, bias_tile, target_block_bytes=2048)

    jax.block_until_ready(out_zero_bias)
    jax.block_until_ready(out)
    jax.block_until_ready(out_odd)
    jax.block_until_ready(out_tile)

    ref_zero = _reference(x, module.bias)
    ref = _reference(x, bias)
    ref_odd = _reference(x_odd, bias_odd)
    ref_tile = _reference(x_tile, bias_tile)

    assert out_zero_bias.shape == x.shape and out.shape == x.shape
    assert out_odd.shape == x_odd.shape and out_tile.shape == x_tile.shape
    assert jnp.allclose(out_zero_bias, ref_zero, atol=1e-5, rtol=1e-5)
    assert jnp.allclose(out, ref, atol=1e-5, rtol=1e-5)
    assert jnp.allclose(out_odd, ref_odd, atol=1e-5, rtol=1e-5)
    assert jnp.allclose(out_tile, ref_tile, atol=1e-5, rtol=1e-5)

    print("KERNEL_OK")
</pallas_src>

<mosaic_0001>
module attributes {stable_mosaic.version = 11 : i64} {
  func.func @_fused_lrelu_kernel(%arg0: i32, %arg1: i32, %arg2: memref<8x512xf32, #tpu.memory_space<vmem>>, %arg3: memref<8x1xf32, #tpu.memory_space<vmem>>, %arg4: memref<8x512xf32, #tpu.memory_space<vmem>>) attributes {dimension_semantics = [#tpu.dimension_semantics<parallel>, #tpu.dimension_semantics<parallel>], iteration_bounds = array<i64: 1, 1>, scalar_prefetch = 0 : i64, scratch_operands = 0 : i64, tpu.core_type = #tpu.core_type<tc>, window_params = [{transform_indices = @transform_0, window_bounds = array<i64: 8, 512>}, {transform_indices = @transform_1, window_bounds = array<i64: 8, 1>}, {transform_indices = @transform_2, window_bounds = array<i64: 8, 512>}]} {
    %c0 = arith.constant 0 : index
    %c0_0 = arith.constant 0 : index
    %0 = vector.load %arg2[%c0, %c0_0] : memref<8x512xf32, #tpu.memory_space<vmem>>, vector<8x512xf32>
    %c0_1 = arith.constant 0 : index
    %c0_2 = arith.constant 0 : index
    %1 = vector.load %arg3[%c0_1, %c0_2] : memref<8x1xf32, #tpu.memory_space<vmem>>, vector<8x1xf32>
    %2 = vector.broadcast %1 : vector<8x1xf32> to vector<8x512xf32>
    %3 = arith.addf %0, %2 : vector<8x512xf32>
    %cst = arith.constant 0.000000e+00 : f32
    %4 = vector.broadcast %cst : f32 to vector<8x512xf32>
    %5 = arith.cmpf oge, %3, %4 : vector<8x512xf32>
    %cst_3 = arith.constant 1.41421354 : f32
    %cst_4 = arith.constant 0.282842726 : f32
    %6 = vector.broadcast %cst_3 : f32 to vector<8x512xf32>
    %7 = vector.broadcast %cst_4 : f32 to vector<8x512xf32>
    %8 = arith.select %5, %6, %7 : vector<8x512xi1>, vector<8x512xf32>
    %9 = arith.mulf %3, %8 : vector<8x512xf32>
    %c0_5 = arith.constant 0 : index
    %c0_6 = arith.constant 0 : index
    %10 = vector.load %arg4[%c0_5, %c0_6] : memref<8x512xf32, #tpu.memory_space<vmem>>, vector<8x512xf32>
    tpu.vector_store %arg4[%c0_5, %c0_6], %9 {strides = array<i32>} : memref<8x512xf32, #tpu.memory_space<vmem>>, vector<8x512xf32>,
    return
  }
  func.func @transform_0(%arg0: i32, %arg1: i32) -> (i32, i32) {
    %c0_i32 = arith.constant 0 : i32
    return %arg0, %arg1 : i32, i32
  }
  func.func @transform_1(%arg0: i32, %arg1: i32) -> (i32, i32) {
    %c0_i32 = arith.constant 0 : i32
    %c0_i32_0 = arith.constant 0 : i32
    return %arg0, %c0_i32 : i32, i32
  }
  func.func @transform_2(%arg0: i32, %arg1: i32) -> (i32, i32) {
    %c0_i32 = arith.constant 0 : i32
    return %arg0, %arg1 : i32, i32
  }
}

</mosaic_0001>

<llo_original>
// kernel: tpu_custom_call.1
$region0: #{tpu_custom_call.1}
  #allocation0 [shape = 'u32[]', space=smem, size = 0x4, offset = 0x4, fixed_abs, tag = 'smem constant byte address 0x4 - core index']
  #allocation1 [shape = 'u32[144,128]{1,0:T(1,128)}', space=vmem, size = 0x12000, scoped, tag = 'internal scratch']
  %s0 = inlined_call_operand.hbm [shape: f32[8,512], index: 0, kind: input, shape index: {}]
  %s1 = inlined_call_operand.vmem [shape: f32[8,1], index: 1, kind: input, shape index: {}]
  %s2 = inlined_call_operand.hbm [shape: f32[8,512], index: 2, kind: output, shape index: {}]
  %s3 = sld [smem:[#allocation0]]
  $region22: #{tpu_custom_call.1} parent=0
    _
  %s5 = ssub.s32 1, %s3
  %s6 = scalar_select 0, %s5, %s3
  $region1: #{tpu_custom_call.1} parent=0
    #allocation2 [shape = 'u8[16384]{0}', space=vmem, size = 0x4000, scoped, tag = 'input window, operand 0, single buffered']
    #allocation3 [shape = 's32[1]{0}', space=sflag, size = 0x4, scoped, tag = 'scoped memory for tpu_custom_call.1']
    #allocation4 [shape = 's32[1]{0}', space=sflag, size = 0x4, scoped, tag = 'scoped memory for tpu_custom_call.1']
    #allocation5 [shape = 'u8[16384]{0}', space=vmem, size = 0x4000, scoped, tag = 'output window, operand 0, single buffered']
    %7 = vsyncpa [#allocation3], 0
    %8 = vsyncpa [#allocation4], 0
    // Predicated region
    $region2: #{tpu_custom_call.1} parent=1 // pred_check
      _
    $region3: #{tpu_custom_call.1} parent=1 // pred_check_branch
      %10 = sbr.rel (0) target = $region5
    $region4: #{tpu_custom_call.1} parent=1 // pred_region
      %s12 = ssub.s32 512, 512
      %13 = vsyncadd [#allocation3], %s12
      %s15 = sshll.u32 [#allocation2], 4
      %s16 = int_to_ptr.vmem [resolvable:$true] %s15
      %18 = dma.hbm_to_vmem [thread:$0]  %s0, 512, %s16, [#allocation3]
    $region5: #{tpu_custom_call.1} parent=1 // pred_fallthru
      _
    // Predicated region
    $region6: #{tpu_custom_call.1} parent=1 // pred_check
      _
    $region7: #{tpu_custom_call.1} parent=1 // pred_check_branch
      %20 = sbr.rel (0) target = $region9
    $region8: #{tpu_custom_call.1} parent=1 // pred_region
      _
    $region9: #{tpu_custom_call.1} parent=1 // pred_fallthru
      _
    // Predicated region
    $region10: #{tpu_custom_call.1} parent=1 // pred_check
      _
    $region11: #{tpu_custom_call.1} parent=1 // pred_check_branch
      %22 = sbr.rel (0) target = $region13
    $region12: #{tpu_custom_call.1} parent=1 // pred_region
      %23 = dma.done [#allocation3], 512
    $region13: #{tpu_custom_call.1} parent=1 // pred_fallthru
      _
    %v24 = vld [vmem:[#allocation2] sm:$0xff]
    %v25 = vld [vmem:[#allocation2 + $0x8] sm:$0xff]
    %v26 = vld [vmem:[#allocation2 + $0x10] sm:$0xff]
    %v27 = vld [vmem:[#allocation2 + $0x18] sm:$0xff]
    %v28 = vld [vmem:[%s1] sm:$0xff]
    %30 = vset.pattern.permute.xlu0 0
    %31 = vperm.xlu0 %30, %v28
    %v32 = vpop.permute.xlu0 %31
    %v34 = vadd.f32 %v24, %v32
    %v35 = vadd.f32 %v25, %v32
    %v36 = vadd.f32 %v26, %v32
    %v37 = vadd.f32 %v27, %v32
    %vm38 = vcmp.ge.f32.partialorder %v34, 0.0
    %vm39 = vcmp.ge.f32.partialorder %v35, 0.0
    %vm40 = vcmp.ge.f32.partialorder %v36, 0.0
    %vm41 = vcmp.ge.f32.partialorder %v37, 0.0
    %v42 = vsel %vm38, 1.4142135, 0.28284273
    %v43 = vsel %vm39, 1.4142135, 0.28284273
    %v44 = vsel %vm40, 1.4142135, 0.28284273
    %v45 = vsel %vm41, 1.4142135, 0.28284273
    %v46 = vmul.f32 %v34, %v42
    %v47 = vmul.f32 %v35, %v43
    %v48 = vmul.f32 %v36, %v44
    %v49 = vmul.f32 %v37, %v45
    %50 = vst [vmem:[#allocation5] sm:$0xff] %v46
    %51 = vst [vmem:[#allocation5 + $0x8] sm:$0xff] %v47
    %52 = vst [vmem:[#allocation5 + $0x10] sm:$0xff] %v48
    %53 = vst [vmem:[#allocation5 + $0x18] sm:$0xff] %v49
    // Predicated region
    $region14: #{tpu_custom_call.1} parent=1 // pred_check
      _
    $region15: #{tpu_custom_call.1} parent=1 // pred_check_branch
      %55 = sbr.rel (0) target = $region17
    $region16: #{tpu_custom_call.1} parent=1 // pred_region
      %s57 = ssub.s32 512, 512
      %58 = vsyncadd [#allocation4], %s57
      %s60 = sshll.u32 [#allocation5], 4
      %s61 = int_to_ptr.vmem [resolvable:$true] %s60
      %63 = dma.vmem_to_hbm [thread:$0]  %s61, 512, %s2, [#allocation4]
    $region17: #{tpu_custom_call.1} parent=1 // pred_fallthru
      _
    // Predicated region
    $region18: #{tpu_custom_call.1} parent=1 // pred_check
      _
    $region19: #{tpu_custom_call.1} parent=1 // pred_check_branch
      %65 = sbr.rel (0) target = $region21
    $region20: #{tpu_custom_call.1} parent=1 // pred_region
      %66 = dma.done [#allocation4], 512
    $region21: #{tpu_custom_call.1} parent=1 // pred_fallthru
      _
    %67 = vsyncpa [#allocation3], 1
    %68 = vsyncpa [#allocation4], 1

</llo_original>
